<compile_context>
chip_gen: v7x
topology: tpu7x:2x2x1
jax: 0.10.0
libtpu: 0.0.40
codegen_flags: <defaults>
</compile_context>

<pallas_src>
import functools
import math

import jax
import jax.numpy as jnp
from jax import lax
from jax.experimental import pallas as pl
from jax.experimental.pallas import tpu as pltpu


# ----------------------------------------------------------------------------
# helpers
# ----------------------------------------------------------------------------
def _round_up(x, m):
    return ((x + m - 1) // m) * m


def _tile_and_pad(dim, target):
    """Pick a tile size and padded extent for one matmul axis.

    Small dims use the full extent (always a legal block shape); larger dims
    use the (8/128-aligned) target tile and the array is zero-padded up to a
    multiple of it so every block is full-sized (zero padding is exact for
    y = x @ W + b).
    """
    if dim <= target:
        return dim, dim
    return target, _round_up(dim, target)


# ----------------------------------------------------------------------------
# Kernel 1: tiled dense (Linear) layer   y = x @ W + b
# ----------------------------------------------------------------------------
def _linear_kernel(x_ref, w_ref, b_ref, o_ref, acc_ref):
    """One (tm, tn) output tile; K (reduction) is the innermost grid axis."""
    @pl.when(pl.program_id(2) == 0)
    def _init():
        acc_ref[...] = jnp.zeros_like(acc_ref)

    acc_ref[...] += jnp.dot(x_ref[...], w_ref[...],
                            preferred_element_type=jnp.float32)

    @pl.when(pl.program_id(2) == pl.num_programs(2) - 1)
    def _finalize():
        o_ref[...] = (acc_ref[...] + b_ref[...].astype(jnp.float32)).astype(o_ref.dtype)


def linear_pallas(x, w, b, *, tm=256, tn=256, tk=512):
    """x: (M, Din), w: (Din, Dout), b: (Dout,) -> (M, Dout).

    Tiled + double-buffered (P1 + P3): the grid streams x / W tiles from HBM
    while the MXU works on the previous tile; the f32 accumulator lives in a
    VMEM scratch that persists across the K axis.
    """
    M, K = x.shape
    N = w.shape[1]
    tm, Mp = _tile_and_pad(M, tm)
    tn, Np = _tile_and_pad(N, tn)
    tk, Kp = _tile_and_pad(K, tk)

    xp = x if (Mp == M and Kp == K) else jnp.pad(x, ((0, Mp - M), (0, Kp - K)))
    wp = w if (Kp == K and Np == N) else jnp.pad(w, ((0, Kp - K), (0, Np - N)))
    bp = (b if Np == N else jnp.pad(b, (0, Np - N))).reshape(1, Np)

    grid = (Mp // tm, Np // tn, Kp // tk)
    out = pl.pallas_call(
        _linear_kernel,
        out_shape=jax.ShapeDtypeStruct((Mp, Np), x.dtype),
        grid=grid,
        in_specs=[
            pl.BlockSpec((tm, tk), lambda i, j, k: (i, k)),
            pl.BlockSpec((tk, tn), lambda i, j, k: (k, j)),
            pl.BlockSpec((1, tn), lambda i, j, k: (0, j)),
        ],
        out_specs=pl.BlockSpec((tm, tn), lambda i, j, k: (i, j)),
        scratch_shapes=[pltpu.VMEM((tm, tn), jnp.float32)],
        compiler_params=pltpu.CompilerParams(
            dimension_semantics=("parallel", "parallel", "arbitrary"),
            vmem_limit_bytes=48 * 1024 * 1024,   # within v7x's 64 MiB VMEM
        ),
    )(xp, wp, bp)
    if Mp != M or Np != N:
        out = out[:M, :N]
    return out


# ----------------------------------------------------------------------------
# Kernel 2: scaled dot-product attention, all heads of one batch row per step
#   scores = (q / sqrt(d_k)) @ k^T ; masked_fill ; softmax ; ctx = attn @ v
# ----------------------------------------------------------------------------
def _attn_kernel(q_ref, k_ref, v_ref, m_ref, ctx_ref, attn_ref, *, scale):
    # q: (1, H, tq, d_k), k: (1, H, Lk, d_k), v: (1, H, Lk, d_v)
    q = q_ref[0].astype(jnp.float32) * scale            # (H, tq, d_k)
    k = k_ref[0].astype(jnp.float32)                    # (H, Lk, d_k)
    v = v_ref[0]                                         # (H, Lk, d_v)

    # Head-batched; contraction expressed via dimension numbers so no
    # transposed copy of k is ever materialized.
    scores = lax.dot_general(
        q, k, dimension_numbers=(((2,), (2,)), ((0,), (0,))),
        preferred_element_type=jnp.float32)              # (H, tq, Lk)

    m = m_ref[0]                                         # (1 or tq, Lk); 1 == masked out
    scores = jnp.where(m[None, :, :] > 0, jnp.float32(-1e18), scores)

    # numerically-stable softmax (matches torch.nn.Softmax(dim=-1))
    scores = scores - jnp.max(scores, axis=-1, keepdims=True)
    e = jnp.exp(scores)
    denom = jnp.sum(e, axis=-1, keepdims=True)
    attn = e * pl.reciprocal(denom, approx=False)        # EUP reciprocal + VPU mul

    attn_ref[0] = attn                                   # full-extent store

    ctx = lax.dot_general(
        attn.astype(v.dtype), v,
        dimension_numbers=(((2,), (1,)), ((0,), (0,))),
        preferred_element_type=jnp.float32)               # (H, tq, d_v)
    ctx_ref[0] = ctx.astype(ctx_ref.dtype)


def attention_pallas(q, k, v, mask_i32, d_k):
    """q: (B, H, Lq, d_k), k: (B, H, Lk, d_k), v: (B, H, Lk, d_v),
    mask_i32: (B, 1 or Lq, Lk).
    Returns (context (B, H, Lq, d_v), attn (B, H, Lq, Lk) f32)."""
    B, H, Lq, _ = q.shape
    Lk = k.shape[2]
    d_v = v.shape[3]
    scale = 1.0 / math.sqrt(d_k)

    # Query tile: full extent when short, else a 128-aligned divisor of Lq so
    # the per-step score block (H, tq, Lk) stays bounded in VMEM.
    tq = Lq
    if Lq > 512:
        for t in (512, 256, 128):
            if Lq % t == 0:
                tq = t
                break
    nq = Lq // tq

    # Mask may be (B, 1, Lk) (broadcast over queries) or (B, Lq, Lk).  It is
    # fetched once per batch row / q-tile; k/v blocks are constant across the
    # inner q-tile axis so their re-DMA is skipped on consecutive steps.
    if mask_i32.shape[1] == 1:
        mask_spec = pl.BlockSpec((1, 1, Lk), lambda b, qi: (b, 0, 0))
    else:
        mask_spec = pl.BlockSpec((1, tq, Lk), lambda b, qi: (b, qi, 0))

    kernel = functools.partial(_attn_kernel, scale=scale)
    ctx, attn = pl.pallas_call(
        kernel,
        out_shape=(
            jax.ShapeDtypeStruct((B, H, Lq, d_v), q.dtype),
            jax.ShapeDtypeStruct((B, H, Lq, Lk), jnp.float32),
        ),
        grid=(B, nq),
        in_specs=[
            pl.BlockSpec((1, H, tq, d_k), lambda b, qi: (b, 0, qi, 0)),
            pl.BlockSpec((1, H, Lk, d_k), lambda b, qi: (b, 0, 0, 0)),
            pl.BlockSpec((1, H, Lk, d_v), lambda b, qi: (b, 0, 0, 0)),
            mask_spec,
        ],
        out_specs=(
            pl.BlockSpec((1, H, tq, d_v), lambda b, qi: (b, 0, qi, 0)),
            pl.BlockSpec((1, H, tq, Lk), lambda b, qi: (b, 0, qi, 0)),
        ),
        compiler_params=pltpu.CompilerParams(
            dimension_semantics=("parallel", "parallel"),  # shard over both TCs
            vmem_limit_bytes=48 * 1024 * 1024,
        ),
    )(q, k, v, mask_i32)
    return ctx, attn


# ----------------------------------------------------------------------------
# Module wrapper (glue / parameter handling in plain JAX)
# ----------------------------------------------------------------------------
def init_mha_params(rng, head_count, model_dim, d_k, d_v, dtype=jnp.float32):
    """Deterministic synthetic parameters. Weights stored as (in, out) so the
    kernel computes y = x @ W + b (PyTorch Linear stores (out, in))."""
    keys = jax.random.split(rng, 8)

    def lin(kw, kb, din, dout):
        bound = 1.0 / math.sqrt(din)
        w = jax.random.uniform(kw, (din, dout), dtype, -bound, bound)
        b = jax.random.uniform(kb, (dout,), dtype, -bound, bound)
        return w, b

    wk, bk = lin(keys[0], keys[1], model_dim, head_count * d_k)
    wq, bq = lin(keys[2], keys[3], model_dim, head_count * d_k)
    wv, bv = lin(keys[4], keys[5], model_dim, head_count * d_v)
    wo, bo = lin(keys[6], keys[7], head_count * d_v, model_dim)
    params = dict(wk=wk, bk=bk, wq=wq, bq=bq, wv=wv, bv=bv, wo=wo, bo=bo)
    # Pre-fused projection weights so self/cross attention can read the
    # activation from HBM once ([q|k|v] and [k|v]).
    params["w_qkv"] = jnp.concatenate([wq, wk, wv], axis=1)
    params["b_qkv"] = jnp.concatenate([bq, bk, bv])
    params["w_kv"] = jnp.concatenate([wk, wv], axis=1)
    params["b_kv"] = jnp.concatenate([bk, bv])
    return params


def multi_headed_attention(params, key, value, query, mask=None, *,
                           head_count, d_k, d_v):
    """Forward pass mirroring MultiHeadedAttention.forward (eval mode,
    no layer_cache / relative positions / coverage).

    key, value: (B, key_len, model_dim); query: (B, query_len, model_dim)
    mask: optional bool/int (B, query_len, key_len) or (B, 1, key_len),
          True/1 = masked out.
    Returns (final_output (B, query_len, model_dim),
             attn_per_head: list of H arrays (B, query_len, key_len),
             coverage_vector: None)
    """
    B, Lk, D = key.shape
    Lq = query.shape[1]
    H = head_count
    dk_tot = H * d_k

    # --- linear projections (tiled Pallas matmuls, fused when inputs coincide) ---
    # (identity-based fusion check; inside jit the tensors are distinct tracers
    #  and we simply fall back to separate projections)
    if (query is key) and (key is value):
        proj = linear_pallas(query.reshape(B * Lq, D), params["w_qkv"], params["b_qkv"])
        q_proj = proj[:, :dk_tot]
        k_proj = proj[:, dk_tot:2 * dk_tot]
        v_proj = proj[:, 2 * dk_tot:]
    elif key is value:
        q_proj = linear_pallas(query.reshape(B * Lq, D), params["wq"], params["bq"])
        kv = linear_pallas(key.reshape(B * Lk, D), params["w_kv"], params["b_kv"])
        k_proj = kv[:, :dk_tot]
        v_proj = kv[:, dk_tot:]
    else:
        q_proj = linear_pallas(query.reshape(B * Lq, D), params["wq"], params["bq"])
        k_proj = linear_pallas(key.reshape(B * Lk, D), params["wk"], params["bk"])
        v_proj = linear_pallas(value.reshape(B * Lk, D), params["wv"], params["bv"])

    # shape(): (B*L, H*d) -> (B, H, L, d).  Kept as a cheap XLA reshape/transpose
    # so every in-kernel matmul is a canonical head-batched MXU op.
    # TODO(synk): fold the head split/merge into the BlockSpec index_maps once
    # sub-lane-tile head blocks are worth the in-kernel relayouts.
    def split_heads(x, L, d):
        return x.reshape(B, L, H, d).transpose(0, 2, 1, 3)

    q_h = split_heads(q_proj, Lq, d_k)
    k_h = split_heads(k_proj, Lk, d_k)
    v_h = split_heads(v_proj, Lk, d_v)

    if mask is None:
        mask_i32 = jnp.zeros((B, 1, Lk), jnp.int32)
    else:
        mask_i32 = mask.astype(jnp.int32)
        if mask_i32.ndim == 2:                       # (B, Lk) -> (B, 1, Lk)
            mask_i32 = mask_i32[:, None, :]

    # --- attention core (Pallas kernel, all heads of a batch row per step) ---
    # TODO(synk): for very long sequences with attn output disabled, switch to
    # a flash-style Lk-tiled online softmax instead of full score blocks.
    ctx_h, attn = attention_pallas(q_h, k_h, v_h, mask_i32, d_k)

    # unshape(): (B, H, Lq, d_v) -> (B*Lq, H*d_v), lane-dense for the output proj
    context = ctx_h.transpose(0, 2, 1, 3).reshape(B * Lq, H * d_v)

    # TODO(synk): dropout on attn omitted (eval-mode identity).
    final_output = linear_pallas(context, params["wo"], params["bo"]).reshape(B, Lq, D)

    attn_per_head = [attn[:, h] for h in range(H)]
    return final_output, attn_per_head, None


# ----------------------------------------------------------------------------
if __name__ == "__main__":
    B, L, D = 2, 8, 32
    H, d_k, d_v = 4, 8, 8

    root = jax.random.PRNGKey(0)
    kp, kx, kq = jax.random.split(root, 3)

    params = init_mha_params(kp, H, D, d_k, d_v)

    # ---------------- pure-JAX reference ------------------------------------
    def ref_forward(key_in, value_in, query_in, mask):
        hp = jax.lax.Precision.HIGHEST

        def lin(x, w, b):
            return jnp.dot(x, w, precision=hp) + b

        Lk_, Lq_ = key_in.shape[1], query_in.shape[1]
        kp_ = lin(key_in, params["wk"], params["bk"]).reshape(B, Lk_, H, d_k).transpose(0, 2, 1, 3)
        qp_ = lin(query_in, params["wq"], params["bq"]).reshape(B, Lq_, H, d_k).transpose(0, 2, 1, 3)
        vp_ = lin(value_in, params["wv"], params["bv"]).reshape(B, Lk_, H, d_v).transpose(0, 2, 1, 3)
        scores = jnp.einsum("bhqd,bhkd->bhqk", qp_ / math.sqrt(d_k), kp_, precision=hp)
        if mask is not None:
            scores = jnp.where(mask.astype(bool)[:, None], -1e18, scores)
        a = jax.nn.softmax(scores, axis=-1)
        ctx = jnp.einsum("bhqk,bhkd->bhqd", a, vp_, precision=hp)
        ctx = ctx.transpose(0, 2, 1, 3).reshape(B, Lq_, H * d_v)
        return lin(ctx, params["wo"], params["bo"]), a

    # ---------------- test 1: self-attention + mask (fused QKV path) --------
    x = jax.random.normal(kx, (B, L, D), jnp.float32)
    lengths = jnp.array([L, L - 2])
    mask = jnp.broadcast_to(
        jnp.arange(L)[None, None, :] >= lengths[:, None, None], (B, L, L))

    out, attn_per_head, cov = multi_headed_attention(
        params, x, x, x, mask, head_count=H, d_k=d_k, d_v=d_v)
    jax.block_until_ready(out)
    jax.block_until_ready(attn_per_head)

    ref_out, ref_attn = ref_forward(x, x, x, mask)
    assert jnp.allclose(out, ref_out, atol=1e-4, rtol=1e-4), \
        float(jnp.max(jnp.abs(out - ref_out)))
    assert jnp.allclose(jnp.stack(attn_per_head, 1), ref_attn, atol=1e-4, rtol=1e-4)
    assert cov is None

    # ---------------- test 2: cross-attention, no mask (fused KV path) ------
    Lq2 = 6
    mem = jax.random.normal(jax.random.fold_in(kx, 1), (B, L, D), jnp.float32)
    qry = jax.random.normal(kq, (B, Lq2, D), jnp.float32)
    out2, attn2, _ = multi_headed_attention(
        params, mem, mem, qry, None, head_count=H, d_k=d_k, d_v=d_v)
    jax.block_until_ready(out2)

    ref_out2, ref_attn2 = ref_forward(mem, mem, qry, None)
    assert jnp.allclose(out2, ref_out2, atol=1e-4, rtol=1e-4)
    assert jnp.allclose(jnp.stack(attn2, 1), ref_attn2, atol=1e-4, rtol=1e-4)

    print("KERNEL_OK")
</pallas_src>

<mosaic_0001>
module attributes {stable_mosaic.version = 11 : i64} {
  func.func @_linear_kernel(%arg0: i32, %arg1: i32, %arg2: i32, %arg3: memref<16x32xf32, #tpu.memory_space<vmem>>, %arg4: memref<32x96xf32, #tpu.memory_space<vmem>>, %arg5: memref<1x96xf32, #tpu.memory_space<vmem>>, %arg6: memref<16x96xf32, #tpu.memory_space<vmem>>, %arg7: memref<16x96xf32, #tpu.memory_space<vmem>>) attributes {dimension_semantics = [#tpu.dimension_semantics<parallel>, #tpu.dimension_semantics<parallel>, #tpu.dimension_semantics<arbitrary>], iteration_bounds = array<i64: 1, 1, 1>, scalar_prefetch = 0 : i64, scratch_operands = 1 : i64, tpu.core_type = #tpu.core_type<tc>, window_params = [{transform_indices = @transform_0, window_bounds = array<i64: 16, 32>}, {transform_indices = @transform_1, window_bounds = array<i64: 32, 96>}, {transform_indices = @transform_2, window_bounds = array<i64: 1, 96>}, {transform_indices = @transform_3, window_bounds = array<i64: 16, 96>}]} {
    %c0_i32 = arith.constant 0 : i32
    %0 = arith.cmpi eq, %arg2, %c0_i32 : i32
    %1 = arith.extui %0 : i1 to i32
    %c0_i32_0 = arith.constant 0 : i32
    %2 = arith.cmpi ne, %1, %c0_i32_0 : i32
    scf.if %2 {
      %cst_10 = arith.constant 0.000000e+00 : f32
      %12 = vector.broadcast %cst_10 : f32 to vector<16x96xf32>
      %c0_11 = arith.constant 0 : index
      %c0_12 = arith.constant 0 : index
      %13 = vector.load %arg7[%c0_11, %c0_12] : memref<16x96xf32, #tpu.memory_space<vmem>>, vector<16x96xf32>
      tpu.vector_store %arg7[%c0_11, %c0_12], %12 {strides = array<i32>} : memref<16x96xf32, #tpu.memory_space<vmem>>, vector<16x96xf32>,
    } else {
    }
    %c0 = arith.constant 0 : index
    %c0_1 = arith.constant 0 : index
    %3 = vector.load %arg7[%c0, %c0_1] : memref<16x96xf32, #tpu.memory_space<vmem>>, vector<16x96xf32>
    %c0_2 = arith.constant 0 : index
    %c0_3 = arith.constant 0 : index
    %4 = vector.load %arg3[%c0_2, %c0_3] : memref<16x32xf32, #tpu.memory_space<vmem>>, vector<16x32xf32>
    %c0_4 = arith.constant 0 : index
    %c0_5 = arith.constant 0 : index
    %5 = vector.load %arg4[%c0_4, %c0_5] : memref<32x96xf32, #tpu.memory_space<vmem>>, vector<32x96xf32>
    %cst = arith.constant dense<0.000000e+00> : vector<16x96xf32>
    %6 = tpu.matmul %4, %5, %cst {dimension_numbers = #tpu.dot_dimension_numbers<[1], [0], [0], [1], [0, 0, 1, 1], [], []>} : vector<16x32xf32>, vector<32x96xf32>, vector<16x96xf32> -> vector<16x96xf32>
    %7 = arith.addf %3, %6 : vector<16x96xf32>
    %c0_6 = arith.constant 0 : index
    %c0_7 = arith.constant 0 : index
    %8 = vector.load %arg7[%c0_6, %c0_7] : memref<16x96xf32, #tpu.memory_space<vmem>>, vector<16x96xf32>
    tpu.vector_store %arg7[%c0_6, %c0_7], %7 {strides = array<i32>} : memref<16x96xf32, #tpu.memory_space<vmem>>, vector<16x96xf32>,
    %c0_i32_8 = arith.constant 0 : i32
    %9 = arith.cmpi eq, %arg2, %c0_i32_8 : i32
    %10 = arith.extui %9 : i1 to i32
    %c0_i32_9 = arith.constant 0 : i32
    %11 = arith.cmpi ne, %10, %c0_i32_9 : i32
    scf.if %11 {
      %c0_10 = arith.constant 0 : index
      %c0_11 = arith.constant 0 : index
      %12 = vector.load %arg7[%c0_10, %c0_11] : memref<16x96xf32, #tpu.memory_space<vmem>>, vector<16x96xf32>
      %c0_12 = arith.constant 0 : index
      %c0_13 = arith.constant 0 : index
      %13 = vector.load %arg5[%c0_12, %c0_13] : memref<1x96xf32, #tpu.memory_space<vmem>>, vector<1x96xf32>
      %14 = vector.broadcast %13 : vector<1x96xf32> to vector<16x96xf32>
      %15 = arith.addf %12, %14 : vector<16x96xf32>
      %c0_14 = arith.constant 0 : index
      %c0_15 = arith.constant 0 : index
      %16 = vector.load %arg6[%c0_14, %c0_15] : memref<16x96xf32, #tpu.memory_space<vmem>>, vector<16x96xf32>
      tpu.vector_store %arg6[%c0_14, %c0_15], %15 {strides = array<i32>} : memref<16x96xf32, #tpu.memory_space<vmem>>, vector<16x96xf32>,
    } else {
    }
    return
  }
  func.func @transform_0(%arg0: i32, %arg1: i32, %arg2: i32) -> (i32, i32) {
    %c0_i32 = arith.constant 0 : i32
    return %arg0, %arg2 : i32, i32
  }
  func.func @transform_1(%arg0: i32, %arg1: i32, %arg2: i32) -> (i32, i32) {
    %c0_i32 = arith.constant 0 : i32
    return %arg2, %arg1 : i32, i32
  }
  func.func @transform_2(%arg0: i32, %arg1: i32, %arg2: i32) -> (i32, i32) {
    %c0_i32 = arith.constant 0 : i32
    %c0_i32_0 = arith.constant 0 : i32
    return %c0_i32, %arg1 : i32, i32
  }
  func.func @transform_3(%arg0: i32, %arg1: i32, %arg2: i32) -> (i32, i32) {
    %c0_i32 = arith.constant 0 : i32
    return %arg0, %arg1 : i32, i32
  }
}

</mosaic_0001>

<llo_original>
// kernel: tpu_custom_call.1
$region0: #{tpu_custom_call.1}
  #allocation0 [shape = 'u32[]', space=smem, size = 0x4, offset = 0x4, fixed_abs, tag = 'smem constant byte address 0x4 - core index']
  #allocation1 [shape = 'u32[144,128]{1,0:T(1,128)}', space=vmem, size = 0x12000, scoped, tag = 'internal scratch']
  #allocation2 [shape = 'f32[16,96]{1,0:T(8,128)}', space=vmem, size = 0x2000, scoped, tag = 'scratch operand']
  %s0 = inlined_call_operand.hbm [shape: f32[16,32], index: 0, kind: input, shape index: {}]
  %s1 = inlined_call_operand.hbm [shape: f32[32,96], index: 1, kind: input, shape index: {}]
  %s2 = inlined_call_operand.vmem [shape: f32[1,96], index: 2, kind: input, shape index: {}]
  %s3 = inlined_call_operand.hbm [shape: f32[16,96], index: 3, kind: output, shape index: {}]
  %s4 = sld [smem:[#allocation0]]
  $region38: #{tpu_custom_call.1} parent=0
    _
  %s6 = ssub.s32 1, %s4
  %s7 = scalar_select 0, %s6, %s4
  $region1: #{tpu_custom_call.1} parent=0
    #allocation3 [shape = 'u8[8192]{0}', space=vmem, size = 0x2000, scoped, tag = 'input window, operand 0, single buffered']
    #allocation4 [shape = 's32[1]{0}', space=sflag, size = 0x4, scoped, tag = 'scoped memory for tpu_custom_call.1']
    #allocation5 [shape = 's32[1]{0}', space=sflag, size = 0x4, scoped, tag = 'scoped memory for tpu_custom_call.1']
    #allocation6 [shape = 'u8[16384]{0}', space=vmem, size = 0x4000, scoped, tag = 'input window, operand 1, single buffered']
    #allocation7 [shape = 's32[1]{0}', space=sflag, size = 0x4, scoped, tag = 'scoped memory for tpu_custom_call.1']
    #allocation8 [shape = 'u8[8192]{0}', space=vmem, size = 0x2000, scoped, tag = 'output window, operand 0, single buffered']
    %8 = vsyncpa [#allocation4], 0
    %9 = vsyncpa [#allocation7], 0
    %10 = vsyncpa [#allocation5], 0
    // Predicated region
    $region2: #{tpu_custom_call.1} parent=1 // pred_check
      _
    $region3: #{tpu_custom_call.1} parent=1 // pred_check_branch
      %12 = sbr.rel (0) target = $region5
    $region4: #{tpu_custom_call.1} parent=1 // pred_region
      %s14 = ssub.s32 256, 256
      %15 = vsyncadd [#allocation4], %s14
      %s16 = sshll.u32 [#allocation3], 4
      %s17 = int_to_ptr.vmem [resolvable:$true] %s16
      %22 = dma.hbm_to_vmem [thread:$0]  %s0, 256, %s17, [#allocation4], 128, 128, 8
    $region5: #{tpu_custom_call.1} parent=1 // pred_fallthru
      _
    // Predicated region
    $region6: #{tpu_custom_call.1} parent=1 // pred_check
      _
    $region7: #{tpu_custom_call.1} parent=1 // pred_check_branch
      %24 = sbr.rel (0) target = $region9
    $region8: #{tpu_custom_call.1} parent=1 // pred_region
      %s26 = ssub.s32 512, 512
      %27 = vsyncadd [#allocation7], %s26
      %s28 = sshll.u32 [#allocation6], 4
      %s29 = int_to_ptr.vmem [resolvable:$true] %s28
      %34 = dma.hbm_to_vmem [thread:$0]  %s1, 512, %s29, [#allocation7], 128, 128, 8
    $region9: #{tpu_custom_call.1} parent=1 // pred_fallthru
      _
    // Predicated region
    $region10: #{tpu_custom_call.1} parent=1 // pred_check
      _
    $region11: #{tpu_custom_call.1} parent=1 // pred_check_branch
      %36 = sbr.rel (0) target = $region13
    $region12: #{tpu_custom_call.1} parent=1 // pred_region
      _
    $region13: #{tpu_custom_call.1} parent=1 // pred_fallthru
      _
    // Predicated region
    $region14: #{tpu_custom_call.1} parent=1 // pred_check
      _
    $region15: #{tpu_custom_call.1} parent=1 // pred_check_branch
      %38 = sbr.rel (0) target = $region17
    $region16: #{tpu_custom_call.1} parent=1 // pred_region
      %39 = dma.done [#allocation4], 256
    $region17: #{tpu_custom_call.1} parent=1 // pred_fallthru
      _
    // Predicated region
    $region18: #{tpu_custom_call.1} parent=1 // pred_check
      _
    $region19: #{tpu_custom_call.1} parent=1 // pred_check_branch
      %41 = sbr.rel (0) target = $region21
    $region20: #{tpu_custom_call.1} parent=1 // pred_region
      %42 = dma.done [#allocation7], 512
    $region21: #{tpu_custom_call.1} parent=1 // pred_fallthru
      _
    %p43 = scmp.eq.s32.totalorder 0, 0
    // Predicated region
    $region22: #{tpu_custom_call.1} parent=1 // pred_check
      %p44 = pneg %p43
    $region23: #{tpu_custom_call.1} parent=1 // pred_check_branch
      %46 = sbr.rel (%p44) target = $region25
    $region24: #{tpu_custom_call.1} parent=1 // pred_region
      %vm47 = vcmask 785408
      %48 = vst.msk [vmem:[#allocation2] sm:$0xff] %vm47, 0.0
      %49 = vst.msk [vmem:[#allocation2 + $0x8] sm:$0xff] %vm47, 0.0
    $region25: #{tpu_custom_call.1} parent=1 // pred_fallthru
      _
    %v50 = vld [vmem:[#allocation2] sm:$0xff]
    %v51 = vld [vmem:[#allocation2 + $0x8] sm:$0xff]
    %v52 = vld [vmem:[#allocation3] sm:$0xff]
    %v53 = vld [vmem:[#allocation3 + $0x8] sm:$0xff]
    %v54 = vld [vmem:[#allocation6] sm:$0xff]
    %v55 = vld [vmem:[#allocation6 + $0x8] sm:$0xff]
    %v56 = vld [vmem:[#allocation6 + $0x10] sm:$0xff]
    %v57 = vld [vmem:[#allocation6 + $0x18] sm:$0xff]
    %vm58 = vcmask 261120
    %v60 = vsel %vm58, %v52, 0
    %v63 = vsel %vm58, %v53, 0
    %65 = vmatprep.subr.mxu0 0.0
    %66 = vmatpush1.msra.mxu0 %v54
    %67 = vmatprep.subr.mxu0 0.0
    %68 = vmatpush1.msra.mxu0 %v55
    %69 = vmatprep.subr.mxu0 0.0
    %70 = vmatpush1.msra.mxu0 %v56
    %71 = vmatprep.subr.mxu0 0.0
    %72 = vmatpush1.msra.mxu0 %v57
    %73 = vmatprep.subr.mxu0 0.0
    %74 = vmatpush1.msra.mxu0 0.0
    %75 = vmatprep.subr.mxu0 0.0
    %76 = vmatpush1.msra.mxu0 0.0
    %77 = vmatprep.subr.mxu0 0.0
    %78 = vmatpush1.msra.mxu0 0.0
    %79 = vmatprep.subr.mxu0 0.0
    %80 = vmatpush1.msra.mxu0 0.0
    %81 = vmatprep.subr.mxu0 0.0
    %82 = vmatpush1.msra.mxu0 0.0
    %83 = vmatprep.subr.mxu0 0.0
    %84 = vmatpush1.msra.mxu0 0.0
    %85 = vmatprep.subr.mxu0 0.0
    %86 = vmatpush1.msra.mxu0 0.0
    %87 = vmatprep.subr.mxu0 0.0
    %88 = vmatpush1.msra.mxu0 0.0
    %89 = vmatprep.subr.mxu0 0.0
    %90 = vmatpush1.msra.mxu0 0.0
    %91 = vmatprep.subr.mxu0 0.0
    %92 = vmatpush1.msra.mxu0 0.0
    %93 = vmatprep.subr.mxu0 0.0
    %94 = vmatpush1.msra.mxu0 0.0
    %95 = vmatprep.subr.mxu0 0.0
    %96 = vmatpush1.msra.mxu0 0.0
    %97 = vmatprep.subr.mxu0 0.0
    %98 = vmatpush1.msra.mxu0 0.0
    %99 = vmatprep.subr.mxu0 0.0
    %100 = vmatpush1.msra.mxu0 0.0
    %101 = vmatprep.subr.mxu0 0.0
    %102 = vmatpush1.msra.mxu0 0.0
    %103 = vmatprep.subr.mxu0 0.0
    %104 = vmatpush1.msra.mxu0 0.0
    %105 = vmatprep.subr.mxu0 0.0
    %106 = vmatpush1.msra.mxu0 0.0
    %107 = vmatprep.subr.mxu0 0.0
    %108 = vmatpush1.msra.mxu0 0.0
    %109 = vmatprep.subr.mxu0 0.0
    %110 = vmatpush1.msra.mxu0 0.0
    %111 = vmatprep.subr.mxu0 0.0
    %112 = vmatpush1.msra.mxu0 0.0
    %113 = vmatprep.subr.mxu0 0.0
    %114 = vmatpush1.msra.mxu0 0.0
    %115 = vmatprep.subr.mxu0 0.0
    %116 = vmatpush1.msra.mxu0 0.0
    %117 = vmatprep.subr.mxu0 0.0
    %118 = vmatpush1.msra.mxu0 0.0
    %119 = vmatprep.subr.mxu0 0.0
    %120 = vmatpush1.msra.mxu0 0.0
    %121 = vmatprep.subr.mxu0 0.0
    %122 = vmatpush1.msra.mxu0 0.0
    %123 = vmatprep.subr.mxu0 0.0
    %124 = vmatpush1.msra.mxu0 0.0
    %125 = vmatprep.subr.mxu0 0.0
    %126 = vmatpush1.msra.mxu0 0.0
    %127 = vmatprep.subr.mxu0 0.0
    %128 = vmatpush1.msra.mxu0 0.0
    %129 = vmatprep.mubr.f32.mxu0 0.0
    %130 = vmatmul.mubr.f32.gmra.mrb[0].mxu0 %v60
    %v131 = vpop.f32.mrb[0].mxu0
    %v132 = vadd.f32 0.0, %v131
    %v133 = vpop.f32.mrb[0].mxu0
    %134 = vmatprep.mubr.f32.mxu0 0.0
    %135 = vmatmul.mubr.f32.gmra.mrb[0].mxu0 %v63
    %v136 = vpop.f32.mrb[0].mxu0
    %v137 = vadd.f32 0.0, %v136
    %v138 = vpop.f32.mrb[0].mxu0
    %139 = vdwg.mxu0
    %v140 = vadd.f32 %v50, %v132
    %v141 = vadd.f32 %v51, %v137
    %vm142 = vcmask 785408
    %143 = vst.msk [vmem:[#allocation2] sm:$0xff] %vm142, %v140
    %144 = vst.msk [vmem:[#allocation2 + $0x8] sm:$0xff] %vm142, %v141
    // Predicated region
    $region26: #{tpu_custom_call.1} parent=1 // pred_check
      %p145 = pneg %p43
    $region27: #{tpu_custom_call.1} parent=1 // pred_check_branch
      %147 = sbr.rel (%p145) target = $region29
    $region28: #{tpu_custom_call.1} parent=1 // pred_region
      %v148 = vld [vmem:[#allocation2] sm:$0xff]
      %v149 = vld [vmem:[#allocation2 + $0x8] sm:$0xff]
      %v150 = vld [vmem:[%s2] sm:$0x1]
      %v152 = vlaneseq
      %v153 = vshrl.u32 %v152, 7
      %v154 = vsub.s32 0, %v153
      %v155 = vrot.slane %v150, %v154
      %v157 = vadd.f32 %v148, %v155
      %v158 = vadd.f32 %v149, %v155
      %159 = vst.msk [vmem:[#allocation8] sm:$0xff] %vm142, %v157
      %160 = vst.msk [vmem:[#allocation8 + $0x8] sm:$0xff] %vm142, %v158
    $region29: #{tpu_custom_call.1} parent=1 // pred_fallthru
      _
    // Predicated region
    $region30: #{tpu_custom_call.1} parent=1 // pred_check
      _
    $region31: #{tpu_custom_call.1} parent=1 // pred_check_branch
      %162 = sbr.rel (0) target = $region33
    $region32: #{tpu_custom_call.1} parent=1 // pred_region
      %s164 = ssub.s32 256, 256
      %165 = vsyncadd [#allocation5], %s164
      %s166 = sshll.u32 [#allocation8], 4
      %s167 = int_to_ptr.vmem [resolvable:$true] %s166
      %172 = dma.vmem_to_hbm [thread:$0]  %s167, 256, %s3, [#allocation5], 128, 128, 8
    $region33: #{tpu_custom_call.1} parent=1 // pred_fallthru
      _
    // Predicated region
    $region34: #{tpu_custom_call.1} parent=1 // pred_check
      _
    $region35: #{tpu_custom_call.1} parent=1 // pred_check_branch
      %174 = sbr.rel (0) target = $region37
    $region36: #{tpu_custom_call.1} parent=1 // pred_region
      %175 = dma.done [#allocation5], 256
    $region37: #{tpu_custom_call.1} parent=1 // pred_fallthru
      _
    %176 = vsyncpa [#allocation4], 1
    %177 = vsyncpa [#allocation7], 1
    %178 = vsyncpa [#allocation5], 1

</llo_original>
